<compile_context>
chip_gen: v5e
topology: v5e:2x2
jax: 0.10.0
libtpu: 0.0.40
codegen_flags: <defaults>
</compile_context>

<pallas_src>
import functools

import jax
import jax.numpy as jnp
from jax.experimental import pallas as pl
from jax.experimental.pallas import tpu as pltpu


def _round_up(x, m):
    return ((x + m - 1) // m) * m


def _vmem_capacity_bytes():
    """Physical VMEM per TensorCore; conservative 64 MiB fallback (v7x)."""
    try:
        info = pltpu.get_tpu_info()
        cap = getattr(info, "vmem_capacity_bytes", None)
        if cap:
            return int(cap)
    except Exception:
        pass
    return 64 * 1024 * 1024


# --------------------------- kernels ---------------------------------------


def _resident_kernel(x_ref, w_ref, b_ref, o_ref, *, mxu_dtype):
    # x_ref: (tm, Kp), w_ref: (Kp, Np) resident, b_ref: (1, Np), o_ref: (tm, Np)
    x = x_ref[...]
    w = w_ref[...]
    if mxu_dtype is not None:
        x = x.astype(mxu_dtype)   # in-kernel cast: x is read from HBM only once
        w = w.astype(mxu_dtype)   # no-op if wrapper already cast W
    y = jnp.dot(x, w, preferred_element_type=jnp.float32)
    y = y + b_ref[...].astype(jnp.float32)
    o_ref[...] = jnp.maximum(y, 0.0).astype(o_ref.dtype)


def _tiled_kernel(x_ref, w_ref, b_ref, o_ref, acc_ref, *, mxu_dtype):
    # x_ref: (tm, tk), w_ref: (tk, tn), b_ref: (1, tn), o_ref: (tm, tn)
    # acc_ref: (tm, tn) f32 scratch, resident across the K (reduction) axis.
    k = pl.program_id(2)
    x = x_ref[...]
    w = w_ref[...]
    if mxu_dtype is not None:
        x = x.astype(mxu_dtype)
        w = w.astype(mxu_dtype)
    prod = jnp.dot(x, w, preferred_element_type=jnp.float32)

    @pl.when(k == 0)
    def _():
        acc_ref[...] = prod            # direct assign: no zero-init round trip

    @pl.when(k != 0)
    def _():
        acc_ref[...] += prod

    @pl.when(k == pl.num_programs(2) - 1)
    def _():
        y = acc_ref[...] + b_ref[...].astype(jnp.float32)
        o_ref[...] = jnp.maximum(y, 0.0).astype(o_ref.dtype)


# --------------------------- wrapper ----------------------------------------


def line_block(x, w, b, *, tm=None, tn=None, tk=None,
               matmul_dtype=jnp.bfloat16, use_pallas=None,
               force_general=False):
    """y = relu(x @ w + b) on the last axis of x.

    x: (..., in_ch), w: (in_ch, out_ch), b: (out_ch,) -> (..., out_ch).
    matmul_dtype: MXU input dtype (default bf16, ~1e-2 rel. tolerance vs the
      f32 PyTorch reference).  Pass None / jnp.float32 for full f32 matmul.
    """
    in_ch, out_ch = w.shape
    lead_shape = x.shape[:-1]
    m = 1
    for d in lead_shape:
        m *= d
    out_dtype = x.dtype

    # Small-problem gate: XLA's fused matmul+relu wins on tiny shapes.
    if use_pallas is None:
        use_pallas = (m * in_ch * out_ch) >= (1 << 21)
    if not use_pallas:
        y = jnp.maximum(x.reshape(m, in_ch) @ w + b.reshape(1, out_ch), 0.0)
        return y.astype(out_dtype).reshape(*lead_shape, out_ch)

    # Generation-aware VMEM budget: ~96 MiB on 128 MiB parts (v5e/v6e),
    # ~48 MiB on v7x (64 MiB physical), never below the 32 MiB v5e needs.
    vmem_cap = _vmem_capacity_bytes()
    vmem_limit = max(32 * 1024 * 1024, (vmem_cap * 3) // 4)
    vmem_limit = min(vmem_limit, 96 * 1024 * 1024)
    big_vmem = vmem_cap >= 100 * 1024 * 1024

    # MXU input dtype (bf16 default on all generations); acc/epilogue stay f32.
    mxu_dtype = None
    if matmul_dtype is not None and jnp.dtype(matmul_dtype) != jnp.dtype(x.dtype):
        mxu_dtype = jnp.dtype(matmul_dtype)

    x2 = x.reshape(m, in_ch)
    if mxu_dtype is not None:
        w = w.astype(mxu_dtype)           # tiny, one-time weight cast

    # Default tiles: bigger M tiles where VMEM allows (v5e/v6e), safe on v7x.
    if tm is None:
        tm = 1024 if big_vmem else 512
    if tn is None:
        tn = 1024
    if tk is None:
        tk = 1024

    ix = jnp.dtype(x2.dtype).itemsize
    iw = jnp.dtype(w.dtype).itemsize
    io = jnp.dtype(out_dtype).itemsize

    kp_full = _round_up(in_ch, 128)
    np_full = _round_up(out_ch, 128)
    tm_res = min(tm, _round_up(m, 16))

    # ---------------- resident-weight fast path -----------------------------
    # Whole (padded) W + double-buffered x / out tiles + bias must fit VMEM.
    resident_need = 2 * (tm_res * kp_full * ix
                         + kp_full * np_full * iw
                         + np_full * 4
                         + tm_res * np_full * io)
    if mxu_dtype is not None:                      # slack for in-kernel casts
        resident_need += (tm_res * kp_full + kp_full * np_full) * 2
    resident_ok = (not force_general) and resident_need <= int(vmem_limit * 0.8)

    if resident_ok:
        mp = _round_up(m, tm_res)
        # K padding is required for reduction correctness; M/N edge rows/cols
        # are discarded by the final slice.
        x2p = jnp.pad(x2, ((0, mp - m), (0, kp_full - in_ch)))
        wp = jnp.pad(w, ((0, kp_full - in_ch), (0, np_full - out_ch)))
        bp = jnp.pad(b.astype(jnp.float32), (0, np_full - out_ch)).reshape(1, np_full)
        grid = (mp // tm_res,)

        cost = pl.CostEstimate(
            flops=2 * mp * kp_full * np_full,
            transcendentals=0,
            bytes_accessed=(mp * kp_full * ix + kp_full * np_full * iw
                            + 4 * np_full + io * mp * np_full),
        )

        out2 = pl.pallas_call(
            functools.partial(_resident_kernel, mxu_dtype=mxu_dtype),
            out_shape=jax.ShapeDtypeStruct((mp, np_full), out_dtype),
            grid_spec=pltpu.PrefetchScalarGridSpec(
                num_scalar_prefetch=0,
                grid=grid,
                in_specs=[
                    pl.BlockSpec((tm_res, kp_full), lambda i: (i, 0)),   # x tile
                    pl.BlockSpec((kp_full, np_full), lambda i: (0, 0)),  # W resident
                    pl.BlockSpec((1, np_full), lambda i: (0, 0)),        # bias resident
                ],
                out_specs=pl.BlockSpec((tm_res, np_full), lambda i: (i, 0)),
            ),
            compiler_params=pltpu.CompilerParams(
                dimension_semantics=("parallel",),   # M axis shards across v7x TCs
                vmem_limit_bytes=vmem_limit,
            ),
            cost_estimate=cost,
        )(x2p, wp, bp)
        return out2[:m, :out_ch].reshape(*lead_shape, out_ch)

    # ---------------- general tiled path (W too big to stay resident) -------
    tm_eff = min(tm, _round_up(m, 16))
    tk_eff = min(tk, kp_full)
    tn_eff = min(tn, np_full)

    mp = _round_up(m, tm_eff)
    kp = _round_up(in_ch, tk_eff)
    np_ = _round_up(out_ch, tn_eff)
    grid_m, grid_n, grid_k = mp // tm_eff, np_ // tn_eff, kp // tk_eff

    if mxu_dtype is not None and grid_n >= 2:
        # x is re-read grid_n times: one wrapper cast halves those HBM bytes.
        x2 = x2.astype(mxu_dtype)
        ix = jnp.dtype(x2.dtype).itemsize

    x2p = jnp.pad(x2, ((0, mp - m), (0, kp - in_ch)))
    wp = jnp.pad(w, ((0, kp - in_ch), (0, np_ - out_ch)))
    bp = jnp.pad(b.astype(jnp.float32), (0, np_ - out_ch)).reshape(1, np_)

    cost = pl.CostEstimate(
        flops=2 * mp * kp * np_,
        transcendentals=0,
        bytes_accessed=(grid_n * mp * kp * ix          # x re-read per N tile
                        + grid_m * kp * np_ * iw       # W re-read per M tile
                        + 4 * np_ + io * mp * np_),
    )

    out2 = pl.pallas_call(
        functools.partial(_tiled_kernel, mxu_dtype=mxu_dtype),
        out_shape=jax.ShapeDtypeStruct((mp, np_), out_dtype),
        grid_spec=pltpu.PrefetchScalarGridSpec(
            num_scalar_prefetch=0,
            grid=(grid_m, grid_n, grid_k),
            in_specs=[
                pl.BlockSpec((tm_eff, tk_eff), lambda i, j, k: (i, k)),  # x tile
                pl.BlockSpec((tk_eff, tn_eff), lambda i, j, k: (k, j)),  # W tile
                pl.BlockSpec((1, tn_eff), lambda i, j, k: (0, j)),       # bias tile
            ],
            out_specs=pl.BlockSpec((tm_eff, tn_eff), lambda i, j, k: (i, j)),
            scratch_shapes=[pltpu.VMEM((tm_eff, tn_eff), jnp.float32)],
        ),
        compiler_params=pltpu.CompilerParams(
            dimension_semantics=("parallel", "parallel", "arbitrary"),
            vmem_limit_bytes=vmem_limit,
        ),
        cost_estimate=cost,
    )(x2p, wp, bp)

    return out2[:m, :out_ch].reshape(*lead_shape, out_ch)


# --------------------------- self-test --------------------------------------

if __name__ == "__main__":
    key = jax.random.PRNGKey(0)
    kx, kw, kb, kx2, kw2, kb2, kx3, kw3, kb3 = jax.random.split(key, 9)

    # Shapes implied by the module: Linear(in_ch, out_ch) on the last axis.
    batch, seq, in_ch, out_ch = 2, 8, 32, 128
    x = jax.random.normal(kx, (batch, seq, in_ch), dtype=jnp.float32)
    w = jax.random.normal(kw, (in_ch, out_ch), dtype=jnp.float32) * 0.05
    b = jax.random.normal(kb, (out_ch,), dtype=jnp.float32) * 0.05
    y_ref = jnp.maximum(jnp.einsum("bsi,io->bso", x, w) + b, 0.0)

    # 1) Full-f32 Pallas path (resident-weight kernel), tight tolerance.
    y_f32 = jax.block_until_ready(
        line_block(x, w, b, matmul_dtype=None, use_pallas=True))
    assert y_f32.shape == (batch, seq, out_ch)
    assert jnp.allclose(y_f32, y_ref, atol=1e-5, rtol=1e-5)

    # 2) Default bf16-MXU path (f32 accumulation), looser tolerance.
    y_bf16 = jax.block_until_ready(line_block(x, w, b, use_pallas=True))
    assert jnp.allclose(y_bf16, y_ref, atol=2e-2, rtol=2e-2)

    # 3) Ragged shapes (not multiples of any tile) exercise padding/slicing.
    b2_, s2_, ic2, oc2 = 3, 5, 40, 200
    x2 = jax.random.normal(kx2, (b2_, s2_, ic2), dtype=jnp.float32)
    w2 = jax.random.normal(kw2, (ic2, oc2), dtype=jnp.float32) * 0.05
    bb2 = jax.random.normal(kb2, (oc2,), dtype=jnp.float32) * 0.05
    y2_ref = jnp.maximum(jnp.einsum("bsi,io->bso", x2, w2) + bb2, 0.0)
    y2 = jax.block_until_ready(line_block(x2, w2, bb2, use_pallas=True))
    assert y2.shape == (b2_, s2_, oc2)
    assert jnp.allclose(y2, y2_ref, atol=2e-2, rtol=2e-2)
    y2_f32 = jax.block_until_ready(
        line_block(x2, w2, bb2, matmul_dtype=None, use_pallas=True))
    assert jnp.allclose(y2_f32, y2_ref, atol=1e-5, rtol=1e-5)

    # 4) Force the general K-tiled kernel (multi-tile M/N/K reduction path).
    b3_, s3_, ic3, oc3 = 4, 10, 300, 160
    x3 = jax.random.normal(kx3, (b3_, s3_, ic3), dtype=jnp.float32)
    w3 = jax.random.normal(kw3, (ic3, oc3), dtype=jnp.float32) * 0.05
    bb3 = jax.random.normal(kb3, (oc3,), dtype=jnp.float32) * 0.05
    y3_ref = jnp.maximum(jnp.einsum("bsi,io->bso", x3, w3) + bb3, 0.0)
    y3_f32 = jax.block_until_ready(
        line_block(x3, w3, bb3, matmul_dtype=None, use_pallas=True,
                   force_general=True, tm=64, tn=128, tk=128))
    assert jnp.allclose(y3_f32, y3_ref, atol=1e-4, rtol=1e-4)
    y3_bf16 = jax.block_until_ready(
        line_block(x3, w3, bb3, use_pallas=True,
                   force_general=True, tm=64, tn=128, tk=128))
    assert jnp.allclose(y3_bf16, y3_ref, atol=2e-2, rtol=2e-2)

    # 5) Auto-dispatch path (falls back to jnp for tiny problems) must agree.
    y_auto = jax.block_until_ready(line_block(x, w, b))
    assert jnp.allclose(y_auto, y_ref, atol=1e-5, rtol=1e-5)

    print("KERNEL_OK")
</pallas_src>

<mosaic_0001>
module attributes {stable_mosaic.version = 11 : i64} {
  func.func @_resident_kernel(%arg0: i32, %arg1: memref<16x128xf32, #tpu.memory_space<vmem>>, %arg2: memref<128x128xf32, #tpu.memory_space<vmem>>, %arg3: memref<1x128xf32, #tpu.memory_space<vmem>>, %arg4: memref<16x128xf32, #tpu.memory_space<vmem>>) attributes {dimension_semantics = [#tpu.dimension_semantics<parallel>], iteration_bounds = array<i64: 1>, scalar_prefetch = 0 : i64, scratch_operands = 0 : i64, tpu.core_type = #tpu.core_type<tc>, window_params = [{transform_indices = @transform_0, window_bounds = array<i64: 16, 128>}, {pipeline_mode = #tpu.pipeline_mode<synchronous>, transform_indices = @transform_1, window_bounds = array<i64: 128, 128>}, {pipeline_mode = #tpu.pipeline_mode<synchronous>, transform_indices = @transform_2, window_bounds = array<i64: 1, 128>}, {transform_indices = @transform_3, window_bounds = array<i64: 16, 128>}]} {
    %c0 = arith.constant 0 : index
    %c0_0 = arith.constant 0 : index
    %0 = vector.load %arg1[%c0, %c0_0] : memref<16x128xf32, #tpu.memory_space<vmem>>, vector<16x128xf32>
    %c0_1 = arith.constant 0 : index
    %c0_2 = arith.constant 0 : index
    %1 = vector.load %arg2[%c0_1, %c0_2] : memref<128x128xf32, #tpu.memory_space<vmem>>, vector<128x128xf32>
    %cst = arith.constant dense<0.000000e+00> : vector<16x128xf32>
    %2 = tpu.matmul %0, %1, %cst {dimension_numbers = #tpu.dot_dimension_numbers<[1], [0], [0], [1], [0, 0, 1, 1], [], []>} : vector<16x128xf32>, vector<128x128xf32>, vector<16x128xf32> -> vector<16x128xf32>
    %c0_3 = arith.constant 0 : index
    %c0_4 = arith.constant 0 : index
    %3 = vector.load %arg3[%c0_3, %c0_4] : memref<1x128xf32, #tpu.memory_space<vmem>>, vector<1x128xf32>
    %4 = vector.broadcast %3 : vector<1x128xf32> to vector<16x128xf32>
    %5 = arith.addf %2, %4 : vector<16x128xf32>
    %cst_5 = arith.constant 0.000000e+00 : f32
    %6 = vector.broadcast %cst_5 : f32 to vector<16x128xf32>
    %7 = arith.maximumf %5, %6 : vector<16x128xf32>
    %c0_6 = arith.constant 0 : index
    %c0_7 = arith.constant 0 : index
    %8 = vector.load %arg4[%c0_6, %c0_7] : memref<16x128xf32, #tpu.memory_space<vmem>>, vector<16x128xf32>
    tpu.vector_store %arg4[%c0_6, %c0_7], %7 {strides = array<i32>} : memref<16x128xf32, #tpu.memory_space<vmem>>, vector<16x128xf32>,
    return
  }
  func.func @transform_0(%arg0: i32) -> (i32, i32) {
    %c0_i32 = arith.constant 0 : i32
    %c0_i32_0 = arith.constant 0 : i32
    return %arg0, %c0_i32 : i32, i32
  }
  func.func @transform_1(%arg0: i32) -> (i32, i32) {
    %c0_i32 = arith.constant 0 : i32
    %c0_i32_0 = arith.constant 0 : i32
    %c0_i32_1 = arith.constant 0 : i32
    return %c0_i32, %c0_i32_0 : i32, i32
  }
  func.func @transform_2(%arg0: i32) -> (i32, i32) {
    %c0_i32 = arith.constant 0 : i32
    %c0_i32_0 = arith.constant 0 : i32
    %c0_i32_1 = arith.constant 0 : i32
    return %c0_i32, %c0_i32_0 : i32, i32
  }
  func.func @transform_3(%arg0: i32) -> (i32, i32) {
    %c0_i32 = arith.constant 0 : i32
    %c0_i32_0 = arith.constant 0 : i32
    return %arg0, %c0_i32 : i32, i32
  }
}

</mosaic_0001>

<llo_original>
// kernel: tpu_custom_call.1
$region0: #{tpu_custom_call.1}
  #allocation0 [shape = 'u32[]', space=smem, size = 0x4, offset = 0x4, fixed_abs, tag = 'smem constant byte address 0x4 - core index']
  #allocation1 [shape = 'u32[72,128]{1,0:T(1,128)}', space=vmem, size = 0x9000, scoped, tag = 'internal scratch']
  %s0 = inlined_call_operand.hbm [shape: f32[16,128], index: 0, kind: input, shape index: {}]
  %s1 = inlined_call_operand.hbm [shape: f32[128,128], index: 1, kind: input, shape index: {}]
  %s2 = inlined_call_operand.vmem [shape: f32[1,128], index: 2, kind: input, shape index: {}]
  %s3 = inlined_call_operand.hbm [shape: f32[16,128], index: 3, kind: output, shape index: {}]
  %s4 = sld [smem:[#allocation0]]
  $region30: #{tpu_custom_call.1} parent=0
    _
  %s6 = ssub.s32 1, %s4
  %s7 = scalar_select 0, %s6, %s4
  $region1: #{tpu_custom_call.1} parent=0
    #allocation2 [shape = 'u8[8192]{0}', space=vmem, size = 0x2000, scoped, tag = 'input window, operand 0, single buffered']
    #allocation3 [shape = 's32[1]{0}', space=sflag, size = 0x4, scoped, tag = 'scoped memory for tpu_custom_call.1']
    #allocation4 [shape = 's32[1]{0}', space=sflag, size = 0x4, scoped, tag = 'scoped memory for tpu_custom_call.1']
    #allocation5 [shape = 'u8[65536]{0}', space=vmem, size = 0x10000, scoped, tag = 'input window, operand 1, single buffered']
    #allocation6 [shape = 's32[1]{0}', space=sflag, size = 0x4, scoped, tag = 'scoped memory for tpu_custom_call.1']
    #allocation7 [shape = 'u8[8192]{0}', space=vmem, size = 0x2000, scoped, tag = 'output window, operand 0, single buffered']
    %8 = vsyncpa [#allocation3], 0
    %9 = vsyncpa [#allocation6], 0
    %10 = vsyncpa [#allocation4], 0
    // Predicated region
    $region2: #{tpu_custom_call.1} parent=1 // pred_check
      _
    $region3: #{tpu_custom_call.1} parent=1 // pred_check_branch
      %12 = sbr.rel (0) target = $region5
    $region4: #{tpu_custom_call.1} parent=1 // pred_region
      %14 = vsyncadd [#allocation3], 0
      %s15 = sshll.u32 %s0, 4
      %s16 = int_to_ptr.hbm [resolvable:$true] %s15
      %s17 = sshll.u32 [#allocation2], 4
      %s18 = int_to_ptr.vmem [resolvable:$true] %s17
      %23 = dma.hbm_to_vmem [thread:$0]  %s16, 256, %s18, [#allocation3], 128, 128, 8
    $region5: #{tpu_custom_call.1} parent=1 // pred_fallthru
      _
    // Predicated region
    $region6: #{tpu_custom_call.1} parent=1 // pred_check
      _
    $region7: #{tpu_custom_call.1} parent=1 // pred_check_branch
      %25 = sbr.rel (0) target = $region9
    $region8: #{tpu_custom_call.1} parent=1 // pred_region
      %27 = vsyncadd [#allocation6], 0
      %s28 = sshll.u32 %s1, 4
      %s29 = int_to_ptr.hbm [resolvable:$true] %s28
      %s30 = sshll.u32 [#allocation5], 4
      %s31 = int_to_ptr.vmem [resolvable:$true] %s30
      %36 = dma.hbm_to_vmem [thread:$0]  %s29, 2048, %s31, [#allocation6], 128, 128, 8
    $region9: #{tpu_custom_call.1} parent=1 // pred_fallthru
      _
    // Predicated region
    $region10: #{tpu_custom_call.1} parent=1 // pred_check
      _
    $region11: #{tpu_custom_call.1} parent=1 // pred_check_branch
      %38 = sbr.rel (0) target = $region13
    $region12: #{tpu_custom_call.1} parent=1 // pred_region
      _
    $region13: #{tpu_custom_call.1} parent=1 // pred_fallthru
      _
    // Predicated region
    $region14: #{tpu_custom_call.1} parent=1 // pred_check
      _
    $region15: #{tpu_custom_call.1} parent=1 // pred_check_branch
      %40 = sbr.rel (0) target = $region17
    $region16: #{tpu_custom_call.1} parent=1 // pred_region
      %42 = dma.done [#allocation3], 256
    $region17: #{tpu_custom_call.1} parent=1 // pred_fallthru
      _
    // Predicated region
    $region18: #{tpu_custom_call.1} parent=1 // pred_check
      _
    $region19: #{tpu_custom_call.1} parent=1 // pred_check_branch
      %44 = sbr.rel (0) target = $region21
    $region20: #{tpu_custom_call.1} parent=1 // pred_region
      %46 = dma.done [#allocation6], 2048
    $region21: #{tpu_custom_call.1} parent=1 // pred_fallthru
      _
    %v47 = vld [vmem:[#allocation2] sm:$0xff]
    %v48 = vld [vmem:[#allocation2 + $0x8] sm:$0xff]
    %v49 = vld [vmem:[#allocation5] sm:$0xff]
    %v50 = vld [vmem:[#allocation5 + $0x8] sm:$0xff]
    %v51 = vld [vmem:[#allocation5 + $0x10] sm:$0xff]
    %v52 = vld [vmem:[#allocation5 + $0x18] sm:$0xff]
    %v53 = vld [vmem:[#allocation5 + $0x20] sm:$0xff]
    %v54 = vld [vmem:[#allocation5 + $0x28] sm:$0xff]
    %v55 = vld [vmem:[#allocation5 + $0x30] sm:$0xff]
    %v56 = vld [vmem:[#allocation5 + $0x38] sm:$0xff]
    %v57 = vld [vmem:[#allocation5 + $0x40] sm:$0xff]
    %v58 = vld [vmem:[#allocation5 + $0x48] sm:$0xff]
    %v59 = vld [vmem:[#allocation5 + $0x50] sm:$0xff]
    %v60 = vld [vmem:[#allocation5 + $0x58] sm:$0xff]
    %v61 = vld [vmem:[#allocation5 + $0x60] sm:$0xff]
    %v62 = vld [vmem:[#allocation5 + $0x68] sm:$0xff]
    %v63 = vld [vmem:[#allocation5 + $0x70] sm:$0xff]
    %v64 = vld [vmem:[#allocation5 + $0x78] sm:$0xff]
    %v65 = vld [vmem:[%s2] sm:$0x1]
    %v67 = vperm.slane %v65, 0
    %69 = vmatpush.msra.mxu0 %v64
    %70 = vmatpush.msra.mxu0 %v63
    %71 = vmatpush.msra.mxu0 %v62
    %72 = vmatpush.msra.mxu0 %v61
    %73 = vmatpush.msra.mxu0 %v60
    %74 = vmatpush.msra.mxu0 %v59
    %75 = vmatpush.msra.mxu0 %v58
    %76 = vmatpush.msra.mxu0 %v57
    %77 = vmatpush.msra.mxu0 %v56
    %78 = vmatpush.msra.mxu0 %v55
    %79 = vmatpush.msra.mxu0 %v54
    %80 = vmatpush.msra.mxu0 %v53
    %81 = vmatpush.msra.mxu0 %v52
    %82 = vmatpush.msra.mxu0 %v51
    %83 = vmatpush.msra.mxu0 %v50
    %84 = vmatpush.msra.mxu0 %v49
    %85 = vmatmul.f32.gmra.mxu0 %v47
    %v86 = vpop.f32.mrf.mxu0
    %v87 = vadd.f32 %v67, %v86
    %88 = vmatmul.f32.gmra.mxu0 %v48
    %v89 = vpop.f32.mrf.mxu0
    %v90 = vadd.f32 %v67, %v89
    %91 = vdwg.mxu0
    %v92 = vmax.f32 %v87, 0.0
    %v93 = vmax.f32 %v90, 0.0
    %94 = vst [vmem:[#allocation7] sm:$0xff] %v92
    %95 = vst [vmem:[#allocation7 + $0x8] sm:$0xff] %v93
    // Predicated region
    $region22: #{tpu_custom_call.1} parent=1 // pred_check
      _
    $region23: #{tpu_custom_call.1} parent=1 // pred_check_branch
      %97 = sbr.rel (0) target = $region25
    $region24: #{tpu_custom_call.1} parent=1 // pred_region
      %99 = vsyncadd [#allocation4], 0
      %s100 = sshll.u32 [#allocation7], 4
      %s101 = int_to_ptr.vmem [resolvable:$true] %s100
      %s102 = sshll.u32 %s3, 4
      %s103 = int_to_ptr.hbm [resolvable:$true] %s102
      %108 = dma.vmem_to_hbm [thread:$0]  %s101, 256, %s103, [#allocation4], 128, 128, 8
    $region25: #{tpu_custom_call.1} parent=1 // pred_fallthru
      _
    // Predicated region
    $region26: #{tpu_custom_call.1} parent=1 // pred_check
      _
    $region27: #{tpu_custom_call.1} parent=1 // pred_check_branch
      %110 = sbr.rel (0) target = $region29
    $region28: #{tpu_custom_call.1} parent=1 // pred_region
      %112 = dma.done [#allocation4], 256
    $region29: #{tpu_custom_call.1} parent=1 // pred_fallthru
      _
    %113 = vsyncpa [#allocation3], 1
    %114 = vsyncpa [#allocation6], 1
    %115 = vsyncpa [#allocation4], 1

</llo_original>
